<compile_context>
chip_gen: v7x
topology: tpu7x:2x2x1
jax: 0.10.0
libtpu: 0.0.40
codegen_flags: <defaults>
</compile_context>

<pallas_src>
import functools
import math

import numpy as np

import jax
import jax.numpy as jnp
from jax import lax
from jax.experimental import pallas as pl
from jax.experimental.pallas import tpu as pltpu


# ----------------------------------------------------------------------------
# Reference (numpy) positional-embedding helpers from the spec.
# ----------------------------------------------------------------------------
def lambda_init_fn(depth):
    return 0.8 - 0.6 * math.exp(-0.3 * depth)


def get_1d_sincos_pos_embed_from_grid(embed_dim, pos):
    assert embed_dim % 2 == 0
    omega = np.arange(embed_dim // 2, dtype=np.float64)
    omega /= embed_dim / 2.0
    omega = 1.0 / 10000 ** omega
    pos = pos.reshape(-1)
    out = np.einsum('m,d->md', pos, omega)
    emb_sin = np.sin(out)
    emb_cos = np.cos(out)
    return np.concatenate([emb_sin, emb_cos], axis=1)


def get_2d_sincos_pos_embed_from_grid(embed_dim, grid):
    assert embed_dim % 2 == 0
    emb_h = get_1d_sincos_pos_embed_from_grid(embed_dim // 2, grid[0])
    emb_w = get_1d_sincos_pos_embed_from_grid(embed_dim // 2, grid[1])
    return np.concatenate([emb_h, emb_w], axis=1)


def get_2d_sincos_pos_embed(embed_dim, grid_size):
    grid_h = np.arange(grid_size, dtype=np.float32)
    grid_w = np.arange(grid_size, dtype=np.float32)
    grid = np.meshgrid(grid_w, grid_h)
    grid = np.stack(grid, axis=0)
    grid = grid.reshape([2, 1, grid_size, grid_size])
    return get_2d_sincos_pos_embed_from_grid(embed_dim, grid)


# ----------------------------------------------------------------------------
# Small shared math helpers (used both inside kernels and in the reference).
# ----------------------------------------------------------------------------
def _silu(x):
    return x * (1.0 / (1.0 + jnp.exp(-x)))


def _gelu_tanh(x):
    c = 0.7978845608028654  # sqrt(2/pi)
    return 0.5 * x * (1.0 + jnp.tanh(c * (x + 0.044715 * x * x * x)))


def timestep_embedding(t, dim, max_period=10000):
    half = dim // 2
    freqs = jnp.exp(-math.log(max_period) *
                    jnp.arange(half, dtype=jnp.float32) / half)
    args = t.astype(jnp.float32)[:, None] * freqs[None]
    return jnp.concatenate([jnp.cos(args), jnp.sin(args)], axis=-1)


def unpatchify(x, c, p):
    b, t, _ = x.shape
    hw = int(round(t ** 0.5))
    x = x.reshape(b, hw, hw, p, p, c)
    x = jnp.transpose(x, (0, 5, 1, 3, 2, 4))  # nhwpqc -> nchpwq
    return x.reshape(b, c, hw * p, hw * p)


# ----------------------------------------------------------------------------
# Pallas kernel 1: LabelEmbedder gather (collapsed grid, table resident in
# VMEM, lane-dense (B, H) output, effective labels precomputed in wrapper).
# ----------------------------------------------------------------------------
def _label_embed_kernel(eff_ref, table_ref, out_ref):
    def body(i, carry):
        row = eff_ref[i]                                  # SMEM scalar read
        out_ref[pl.ds(i, 1), :] = table_ref[pl.ds(row, 1), :]
        return carry
    lax.fori_loop(0, out_ref.shape[0], body, 0, unroll=True)


def label_embed_pallas(eff_labels, table):
    b = eff_labels.shape[0]
    v, h = table.shape
    grid_spec = pltpu.PrefetchScalarGridSpec(
        num_scalar_prefetch=1,                            # eff labels -> SMEM
        grid=(1,),                                        # single grid step
        in_specs=[pl.BlockSpec((v, h), lambda g, eff: (0, 0))],  # whole table
        out_specs=pl.BlockSpec((b, h), lambda g, eff: (0, 0)),
    )
    return pl.pallas_call(
        _label_embed_kernel,
        grid_spec=grid_spec,
        out_shape=jax.ShapeDtypeStruct((b, h), table.dtype),
        compiler_params=pltpu.CompilerParams(
            dimension_semantics=("arbitrary",)),
    )(eff_labels.astype(jnp.int32), table)


def label_embedder_forward(table, labels, num_classes, dropout_prob, train,
                           force_drop_ids=None, rng=None):
    labels = labels.astype(jnp.int32)
    if (train and dropout_prob > 0) or (force_drop_ids is not None):
        if force_drop_ids is None:
            drop = jax.random.uniform(rng, labels.shape) < dropout_prob
        else:
            drop = force_drop_ids == 1
        labels = jnp.where(drop, jnp.int32(num_classes), labels)
    return label_embed_pallas(labels, table)


# ----------------------------------------------------------------------------
# Pallas kernel 2: Linear (+ optionally fused input activation), full arrays.
# ----------------------------------------------------------------------------
def _linear_kernel(x_ref, w_ref, b_ref, o_ref, *, act):
    x = x_ref[...].astype(jnp.float32)
    if act == "silu":
        x = _silu(x)
    elif act == "gelu_tanh":
        x = _gelu_tanh(x)
    y = jnp.dot(x, w_ref[...].astype(jnp.float32),
                preferred_element_type=jnp.float32)
    y = y + b_ref[...].astype(jnp.float32)
    o_ref[...] = y.astype(o_ref.dtype)


def linear_pallas(x, w, b=None, act=None):
    m, k = x.shape
    k2, n = w.shape
    assert k == k2
    if b is None:
        b = jnp.zeros((n,), x.dtype)
    return pl.pallas_call(
        functools.partial(_linear_kernel, act=act),
        out_shape=jax.ShapeDtypeStruct((m, n), x.dtype),
    )(x, w, b.reshape(1, n))


# ----------------------------------------------------------------------------
# Pallas kernel 3: LayerNorm (no affine) fused with adaLN modulate().
# ----------------------------------------------------------------------------
def _mod_ln_kernel(x_ref, shift_ref, scale_ref, o_ref, *, eps):
    x = x_ref[...].astype(jnp.float32)
    mu = jnp.mean(x, axis=-1, keepdims=True)
    var = jnp.mean(jnp.square(x - mu), axis=-1, keepdims=True)
    xn = (x - mu) * lax.rsqrt(var + eps)
    y = xn * (1.0 + scale_ref[...].astype(jnp.float32)) \
        + shift_ref[...].astype(jnp.float32)
    o_ref[...] = y.astype(o_ref.dtype)


def modulated_layernorm_pallas(x, shift, scale, eps=1e-6):
    b, t, h = x.shape
    return pl.pallas_call(
        functools.partial(_mod_ln_kernel, eps=eps),
        out_shape=jax.ShapeDtypeStruct(x.shape, x.dtype),
    )(x, shift.reshape(b, 1, h), scale.reshape(b, 1, h))


# ----------------------------------------------------------------------------
# Pallas kernel 4: gated residual  x + gate[:, None, :] * y
# ----------------------------------------------------------------------------
def _gated_residual_kernel(x_ref, g_ref, y_ref, o_ref):
    o_ref[...] = x_ref[...] + g_ref[...] * y_ref[...]


def gated_residual_pallas(x, gate, y):
    b, t, h = x.shape
    return pl.pallas_call(
        _gated_residual_kernel,
        out_shape=jax.ShapeDtypeStruct(x.shape, x.dtype),
    )(x, gate.reshape(b, 1, h), y)


# ----------------------------------------------------------------------------
# Pallas kernel 5: differential-attention core, grid over (batch, head).
# ----------------------------------------------------------------------------
def _diff_attn_kernel(q1_ref, q2_ref, k1_ref, k2_ref, v_ref, lam_ref, g_ref,
                      o_ref, *, lambda_init):
    q1 = q1_ref[...].astype(jnp.float32)
    q2 = q2_ref[...].astype(jnp.float32)
    k1 = k1_ref[...].astype(jnp.float32)
    k2 = k2_ref[...].astype(jnp.float32)
    v = v_ref[...].astype(jnp.float32)
    lam = lam_ref[0, 0]

    def _softmax(s):
        m = jnp.max(s, axis=-1, keepdims=True)
        p = jnp.exp(s - m)
        return p / jnp.sum(p, axis=-1, keepdims=True)

    s1 = jnp.einsum("qd,kd->qk", q1, k1, preferred_element_type=jnp.float32)
    s2 = jnp.einsum("qd,kd->qk", q2, k2, preferred_element_type=jnp.float32)
    w = _softmax(s1) - lam * _softmax(s2)
    o = jnp.einsum("qk,kd->qd", w, v, preferred_element_type=jnp.float32)
    # sub-layer RMSNorm (affine) then (1 - lambda_init) scaling
    var = jnp.mean(jnp.square(o), axis=-1, keepdims=True)
    o = o * lax.rsqrt(var + 1e-5)
    o = o * g_ref[...].astype(jnp.float32)
    o = o * (1.0 - lambda_init)
    o_ref[...] = o.astype(o_ref.dtype)


def _diff_attn_core(q1, q2, k1, k2, v, lam, g, *, lambda_init):
    b, nh, t, hd = q1.shape
    dv = v.shape[-1]
    head_spec = pl.BlockSpec((None, None, t, hd), lambda i, j: (i, j, 0, 0))
    v_spec = pl.BlockSpec((None, None, t, dv), lambda i, j: (i, j, 0, 0))
    lam_spec = pl.BlockSpec((1, 1), lambda i, j: (0, 0))
    g_spec = pl.BlockSpec((1, dv), lambda i, j: (0, 0))
    out_spec = pl.BlockSpec((None, None, t, dv), lambda i, j: (i, j, 0, 0))
    return pl.pallas_call(
        functools.partial(_diff_attn_kernel, lambda_init=float(lambda_init)),
        grid=(b, nh),
        in_specs=[head_spec, head_spec, head_spec, head_spec,
                  v_spec, lam_spec, g_spec],
        out_specs=out_spec,
        out_shape=jax.ShapeDtypeStruct((b, nh, t, dv), q1.dtype),
        compiler_params=pltpu.CompilerParams(
            dimension_semantics=("parallel", "parallel")),
    )(q1, q2, k1, k2, v, lam, g)


def diff_attention_pallas(blk, x, nh):
    b, t, h = x.shape
    hd = h // nh // 2
    x2 = x.reshape(b * t, h)
    q = linear_pallas(x2, blk['Wq'])
    k = linear_pallas(x2, blk['Wk'])
    v = linear_pallas(x2, blk['Wv'])
    scaling = hd ** (-0.5)
    q = (q * scaling).reshape(b, t, nh, 2, hd)
    k = k.reshape(b, t, nh, 2, hd)
    q1 = q[:, :, :, 0, :].transpose(0, 2, 1, 3)      # (B, nh, T, hd)
    q2 = q[:, :, :, 1, :].transpose(0, 2, 1, 3)
    k1 = k[:, :, :, 0, :].transpose(0, 2, 1, 3)
    k2 = k[:, :, :, 1, :].transpose(0, 2, 1, 3)
    vv = v.reshape(b, t, nh, 2 * hd).transpose(0, 2, 1, 3)  # (B, nh, T, 2hd)
    lam1 = jnp.exp(jnp.sum(blk['lq1'] * blk['lk1']))
    lam2 = jnp.exp(jnp.sum(blk['lq2'] * blk['lk2']))
    lam = (lam1 - lam2 + blk['lambda_init']).reshape(1, 1).astype(jnp.float32)
    g = blk['subln_w'].reshape(1, 2 * hd)
    attn = _diff_attn_core(q1, q2, k1, k2, vv, lam, g,
                           lambda_init=blk['lambda_init'])
    attn = attn.transpose(0, 2, 1, 3).reshape(b * t, h)
    return linear_pallas(attn, blk['Wo']).reshape(b, t, h)


# ----------------------------------------------------------------------------
# DiT forward (Pallas-backed).
# ----------------------------------------------------------------------------
def dit_block_forward(blk, x, c, cfg):
    b, t, h = x.shape
    mod = linear_pallas(c, blk['ada_W'], blk['ada_b'], act='silu')
    (shift_msa, scale_msa, gate_msa,
     shift_mlp, scale_mlp, gate_mlp) = jnp.split(mod, 6, axis=1)
    hh = modulated_layernorm_pallas(x, shift_msa, scale_msa)
    a = diff_attention_pallas(blk, hh, cfg['num_heads'])
    x = gated_residual_pallas(x, gate_msa, a)
    hh = modulated_layernorm_pallas(x, shift_mlp, scale_mlp)
    m = linear_pallas(hh.reshape(b * t, h), blk['mlp_W1'], blk['mlp_b1'])
    m = linear_pallas(m, blk['mlp_W2'], blk['mlp_b2'], act='gelu_tanh')
    x = gated_residual_pallas(x, gate_mlp, m.reshape(b, t, h))
    return x


def dit_forward(params, x, t, y, cfg, train=False, rng=None):
    b = x.shape[0]
    p = cfg['patch_size']
    ch = cfg['in_channels']
    h = cfg['hidden']
    gh = cfg['input_size'] // p
    tt = gh * gh

    # Patch embedding: stride-p conv == per-patch flatten + matmul.
    xp = x.reshape(b, ch, gh, p, gh, p).transpose(0, 2, 4, 1, 3, 5)
    xp = xp.reshape(b * tt, ch * p * p)
    tok = linear_pallas(xp, params['patch_W'], params['patch_b'])
    tok = tok.reshape(b, tt, h) + params['pos_embed']

    # Timestep embedding MLP (SiLU fused into the second linear kernel).
    tf = timestep_embedding(t, cfg['freq_dim'])
    te = linear_pallas(tf, params['t_W1'], params['t_b1'])
    te = linear_pallas(te, params['t_W2'], params['t_b2'], act='silu')

    # Label embedding (Pallas gather with CFG-drop handled in the wrapper).
    ye = label_embedder_forward(params['y_table'], y, cfg['num_classes'],
                                cfg['class_dropout_prob'], train, rng=rng)
    c = te + ye

    for blk in params['blocks']:
        tok = dit_block_forward(blk, tok, c, cfg)

    mod = linear_pallas(c, params['f_ada_W'], params['f_ada_b'], act='silu')
    shift, scale = jnp.split(mod, 2, axis=1)
    hh = modulated_layernorm_pallas(tok, shift, scale)
    out = linear_pallas(hh.reshape(b * tt, h), params['f_W'], params['f_b'])
    out = out.reshape(b, tt, p * p * cfg['out_channels'])
    return unpatchify(out, cfg['out_channels'], p)


# ----------------------------------------------------------------------------
# Pure-JAX reference (same math, no Pallas) for correctness checking.
# ----------------------------------------------------------------------------
_P = lax.Precision.HIGHEST


def _ref_linear(x, w, b=None, act=None):
    if act == 'silu':
        x = _silu(x)
    elif act == 'gelu_tanh':
        x = _gelu_tanh(x)
    y = jnp.dot(x, w, precision=_P)
    if b is not None:
        y = y + b
    return y


def _ref_layernorm(x, eps=1e-6):
    mu = jnp.mean(x, axis=-1, keepdims=True)
    var = jnp.mean(jnp.square(x - mu), axis=-1, keepdims=True)
    return (x - mu) * lax.rsqrt(var + eps)


def _ref_modulate(x, shift, scale):
    return x * (1.0 + scale[:, None, :]) + shift[:, None, :]


def _ref_diff_attention(blk, x, nh):
    b, t, h = x.shape
    hd = h // nh // 2
    q = jnp.dot(x, blk['Wq'], precision=_P)
    k = jnp.dot(x, blk['Wk'], precision=_P)
    v = jnp.dot(x, blk['Wv'], precision=_P)
    q = q.reshape(b, t, 2 * nh, hd).transpose(0, 2, 1, 3) * (hd ** (-0.5))
    k = k.reshape(b, t, 2 * nh, hd).transpose(0, 2, 1, 3)
    v = v.reshape(b, t, nh, 2 * hd).transpose(0, 2, 1, 3)
    aw = jnp.einsum('bhqd,bhkd->bhqk', q, k, precision=_P)
    aw = jax.nn.softmax(aw, axis=-1)
    lam1 = jnp.exp(jnp.sum(blk['lq1'] * blk['lk1']))
    lam2 = jnp.exp(jnp.sum(blk['lq2'] * blk['lk2']))
    lam = lam1 - lam2 + blk['lambda_init']
    aw = aw.reshape(b, nh, 2, t, t)
    aw = aw[:, :, 0] - lam * aw[:, :, 1]
    a = jnp.einsum('bhqk,bhkd->bhqd', aw, v, precision=_P)
    var = jnp.mean(jnp.square(a), axis=-1, keepdims=True)
    a = a * lax.rsqrt(var + 1e-5) * blk['subln_w']
    a = a * (1.0 - blk['lambda_init'])
    a = a.transpose(0, 2, 1, 3).reshape(b, t, h)
    return jnp.dot(a, blk['Wo'], precision=_P)


def _ref_block(blk, x, c, nh):
    mod = _ref_linear(c, blk['ada_W'], blk['ada_b'], act='silu')
    sm, scm, gm, sp, scp, gp = jnp.split(mod, 6, axis=1)
    h = _ref_modulate(_ref_layernorm(x), sm, scm)
    a = _ref_diff_attention(blk, h, nh)
    x = x + gm[:, None, :] * a
    h = _ref_modulate(_ref_layernorm(x), sp, scp)
    m = _ref_linear(h, blk['mlp_W1'], blk['mlp_b1'])
    m = _ref_linear(m, blk['mlp_W2'], blk['mlp_b2'], act='gelu_tanh')
    x = x + gp[:, None, :] * m
    return x


def dit_forward_ref(params, x, t, y, cfg):
    b = x.shape[0]
    p = cfg['patch_size']
    ch = cfg['in_channels']
    gh = cfg['input_size'] // p
    tt = gh * gh
    xp = x.reshape(b, ch, gh, p, gh, p).transpose(0, 2, 4, 1, 3, 5)
    xp = xp.reshape(b, tt, ch * p * p)
    tok = _ref_linear(xp, params['patch_W'], params['patch_b'])
    tok = tok + params['pos_embed']
    tf = timestep_embedding(t, cfg['freq_dim'])
    te = _ref_linear(tf, params['t_W1'], params['t_b1'])
    te = _ref_linear(te, params['t_W2'], params['t_b2'], act='silu')
    ye = jnp.take(params['y_table'], y.astype(jnp.int32), axis=0)
    c = te + ye
    for blk in params['blocks']:
        tok = _ref_block(blk, tok, c, cfg['num_heads'])
    mod = _ref_linear(c, params['f_ada_W'], params['f_ada_b'], act='silu')
    shift, scale = jnp.split(mod, 2, axis=1)
    h = _ref_modulate(_ref_layernorm(tok), shift, scale)
    out = _ref_linear(h, params['f_W'], params['f_b'])
    return unpatchify(out, cfg['out_channels'], p)


# ----------------------------------------------------------------------------
# Parameter init (random, matching the module's shapes).
# ----------------------------------------------------------------------------
def init_params(key, cfg):
    h = cfg['hidden']
    p = cfg['patch_size']
    ch = cfg['in_channels']
    nh = cfg['num_heads']
    hd = h // nh // 2
    mh = int(h * cfg['mlp_ratio'])
    gh = cfg['input_size'] // p
    keys = iter(jax.random.split(key, 16 + cfg['depth'] * 20))

    def nrm(shape, std=0.1):
        return (jax.random.normal(next(keys), shape) * std).astype(jnp.float32)

    params = {
        'patch_W': nrm((ch * p * p, h)),
        'patch_b': nrm((h,)),
        'pos_embed': jnp.asarray(get_2d_sincos_pos_embed(h, gh),
                                 jnp.float32)[None],
        't_W1': nrm((cfg['freq_dim'], h)), 't_b1': nrm((h,)),
        't_W2': nrm((h, h)), 't_b2': nrm((h,)),
        'y_table': nrm((cfg['num_classes'] + 1, h), 0.02),
        'f_ada_W': nrm((h, 2 * h)), 'f_ada_b': nrm((2 * h,)),
        'f_W': nrm((h, p * p * cfg['out_channels'])),
        'f_b': nrm((p * p * cfg['out_channels'],)),
    }
    blocks = []
    for d in range(cfg['depth']):
        blocks.append({
            'ada_W': nrm((h, 6 * h)), 'ada_b': nrm((6 * h,)),
            'Wq': nrm((h, h)), 'Wk': nrm((h, h)),
            'Wv': nrm((h, h)), 'Wo': nrm((h, h)),
            'lq1': nrm((hd,), 0.1), 'lk1': nrm((hd,), 0.1),
            'lq2': nrm((hd,), 0.1), 'lk2': nrm((hd,), 0.1),
            'subln_w': jnp.ones((2 * hd,), jnp.float32),
            'lambda_init': float(lambda_init_fn(d)),
            'mlp_W1': nrm((h, mh)), 'mlp_b1': nrm((mh,)),
            'mlp_W2': nrm((mh, h)), 'mlp_b2': nrm((h,)),
        })
    params['blocks'] = blocks
    return params


# ----------------------------------------------------------------------------
if __name__ == "__main__":
    cfg = dict(input_size=16, patch_size=2, in_channels=4, out_channels=4,
               hidden=128, depth=2, num_heads=4, mlp_ratio=4.0,
               num_classes=10, class_dropout_prob=0.1, freq_dim=256)

    root = jax.random.PRNGKey(0)
    kp, kx, _, _ = jax.random.split(root, 4)
    params = init_params(kp, cfg)

    B = 2
    x = jax.random.normal(
        kx, (B, cfg['in_channels'], cfg['input_size'], cfg['input_size']),
        jnp.float32)
    t = jnp.array([37.0, 999.0], jnp.float32)
    y = jnp.array([1, 7], jnp.int32)

    out = dit_forward(params, x, t, y, cfg, train=False)
    out = jax.block_until_ready(out)

    ref = dit_forward_ref(params, x, t, y, cfg)

    assert out.shape == (B, cfg['out_channels'],
                         cfg['input_size'], cfg['input_size'])
    assert out.dtype == jnp.float32
    assert bool(jnp.all(jnp.isfinite(out)))
    assert float(jnp.std(out)) > 1e-4
    assert bool(jnp.allclose(out, ref, atol=1e-2, rtol=1e-2)), \
        float(jnp.max(jnp.abs(out - ref)))

    # Standalone check of the LabelEmbedder kernel's CFG label-drop path.
    force = jnp.array([0, 1], jnp.int32)
    emb = label_embedder_forward(params['y_table'], y, cfg['num_classes'],
                                 cfg['class_dropout_prob'], train=True,
                                 force_drop_ids=force)
    emb = jax.block_until_ready(emb)
    eff = jnp.where(force == 1, cfg['num_classes'], y)
    emb_ref = jnp.take(params['y_table'], eff, axis=0)
    assert bool(jnp.allclose(emb, emb_ref, atol=1e-6, rtol=1e-6))

    print("KERNEL_OK")
</pallas_src>

<mosaic_0001>
module attributes {stable_mosaic.version = 11 : i64} {
  func.func @_linear_kernel(%arg0: memref<128x16xf32, #tpu.memory_space<vmem>>, %arg1: memref<16x128xf32, #tpu.memory_space<vmem>>, %arg2: memref<1x128xf32, #tpu.memory_space<vmem>>, %arg3: memref<128x128xf32, #tpu.memory_space<vmem>>) attributes {dimension_semantics = [], scalar_prefetch = 0 : i64, scratch_operands = 0 : i64, tpu.core_type = #tpu.core_type<tc>} {
    %c0 = arith.constant 0 : index
    %c0_0 = arith.constant 0 : index
    %0 = vector.load %arg0[%c0, %c0_0] : memref<128x16xf32, #tpu.memory_space<vmem>>, vector<128x16xf32>
    %c0_1 = arith.constant 0 : index
    %c0_2 = arith.constant 0 : index
    %1 = vector.load %arg1[%c0_1, %c0_2] : memref<16x128xf32, #tpu.memory_space<vmem>>, vector<16x128xf32>
    %cst = arith.constant dense<0.000000e+00> : vector<128x128xf32>
    %2 = tpu.matmul %0, %1, %cst {dimension_numbers = #tpu.dot_dimension_numbers<[1], [0], [0], [1], [0, 0, 1, 1], [], []>} : vector<128x16xf32>, vector<16x128xf32>, vector<128x128xf32> -> vector<128x128xf32>
    %c0_3 = arith.constant 0 : index
    %c0_4 = arith.constant 0 : index
    %3 = vector.load %arg2[%c0_3, %c0_4] : memref<1x128xf32, #tpu.memory_space<vmem>>, vector<1x128xf32>
    %4 = vector.broadcast %3 : vector<1x128xf32> to vector<128x128xf32>
    %5 = arith.addf %2, %4 : vector<128x128xf32>
    %c0_5 = arith.constant 0 : index
    %c0_6 = arith.constant 0 : index
    %6 = vector.load %arg3[%c0_5, %c0_6] : memref<128x128xf32, #tpu.memory_space<vmem>>, vector<128x128xf32>
    tpu.vector_store %arg3[%c0_5, %c0_6], %5 {strides = array<i32>} : memref<128x128xf32, #tpu.memory_space<vmem>>, vector<128x128xf32>,
    return
  }
}

</mosaic_0001>

<llo_original>
// kernel: tpu_custom_call.1
$region0: #{tpu_custom_call.1}
  #allocation0 [shape = 'u32[]', space=smem, size = 0x4, offset = 0x4, fixed_abs, tag = 'smem constant byte address 0x4 - core index']
  #allocation1 [shape = 'u32[144,128]{1,0:T(1,128)}', space=vmem, size = 0x12000, scoped, tag = 'internal scratch']
  %s0 = inlined_call_operand.vmem [shape: f32[128,16], index: 0, kind: input, shape index: {}]
  %s1 = inlined_call_operand.vmem [shape: f32[16,128], index: 1, kind: input, shape index: {}]
  %s2 = inlined_call_operand.vmem [shape: f32[1,128], index: 2, kind: input, shape index: {}]
  %s3 = inlined_call_operand.hbm [shape: f32[128,128], index: 3, kind: output, shape index: {}]
  %s4 = sld [smem:[#allocation0]]
  $region22: #{tpu_custom_call.1} parent=0
    _
  %s6 = ssub.s32 1, %s4
  %s7 = scalar_select 0, %s6, %s4
  $region1: #{tpu_custom_call.1} parent=0
    #allocation2 [shape = 'u8[65536]{0}', space=vmem, size = 0x10000, scoped, tag = 'output window, operand 0, single buffered']
    #allocation3 [shape = 's32[1]{0}', space=sflag, size = 0x4, scoped, tag = 'scoped memory for tpu_custom_call.1']
    %8 = vsyncpa [#allocation3], 0
    // Predicated region
    $region2: #{tpu_custom_call.1} parent=1 // pred_check
      _
    $region3: #{tpu_custom_call.1} parent=1 // pred_check_branch
      %10 = sbr.rel (0) target = $region5
    $region4: #{tpu_custom_call.1} parent=1 // pred_region
      _
    $region5: #{tpu_custom_call.1} parent=1 // pred_fallthru
      _
    // Predicated region
    $region6: #{tpu_custom_call.1} parent=1 // pred_check
      _
    $region7: #{tpu_custom_call.1} parent=1 // pred_check_branch
      %12 = sbr.rel (0) target = $region9
    $region8: #{tpu_custom_call.1} parent=1 // pred_region
      _
    $region9: #{tpu_custom_call.1} parent=1 // pred_fallthru
      _
    // Predicated region
    $region10: #{tpu_custom_call.1} parent=1 // pred_check
      _
    $region11: #{tpu_custom_call.1} parent=1 // pred_check_branch
      %14 = sbr.rel (0) target = $region13
    $region12: #{tpu_custom_call.1} parent=1 // pred_region
      _
    $region13: #{tpu_custom_call.1} parent=1 // pred_fallthru
      _
    %v15 = vld [vmem:[%s0] sm:$0xff]
    %v16 = vld [vmem:[%s0 + $0x8] sm:$0xff]
    %v17 = vld [vmem:[%s0 + $0x10] sm:$0xff]
    %v18 = vld [vmem:[%s0 + $0x18] sm:$0xff]
    %v19 = vld [vmem:[%s0 + $0x20] sm:$0xff]
    %v20 = vld [vmem:[%s0 + $0x28] sm:$0xff]
    %v21 = vld [vmem:[%s0 + $0x30] sm:$0xff]
    %v22 = vld [vmem:[%s0 + $0x38] sm:$0xff]
    %v23 = vld [vmem:[%s0 + $0x40] sm:$0xff]
    %v24 = vld [vmem:[%s0 + $0x48] sm:$0xff]
    %v25 = vld [vmem:[%s0 + $0x50] sm:$0xff]
    %v26 = vld [vmem:[%s0 + $0x58] sm:$0xff]
    %v27 = vld [vmem:[%s0 + $0x60] sm:$0xff]
    %v28 = vld [vmem:[%s0 + $0x68] sm:$0xff]
    %v29 = vld [vmem:[%s0 + $0x70] sm:$0xff]
    %v30 = vld [vmem:[%s0 + $0x78] sm:$0xff]
    %v31 = vld [vmem:[%s1] sm:$0xff]
    %v32 = vld [vmem:[%s1 + $0x8] sm:$0xff]
    %v33 = vld [vmem:[%s2] sm:$0x1]
    %v35 = vlaneseq
    %v36 = vshrl.u32 %v35, 7
    %v37 = vsub.s32 0, %v36
    %v38 = vrot.slane %v33, %v37
    %vm40 = vcmask 130048
    %v42 = vsel %vm40, %v15, 0
    %v45 = vsel %vm40, %v16, 0
    %v48 = vsel %vm40, %v17, 0
    %v51 = vsel %vm40, %v18, 0
    %v54 = vsel %vm40, %v19, 0
    %v57 = vsel %vm40, %v20, 0
    %v60 = vsel %vm40, %v21, 0
    %v63 = vsel %vm40, %v22, 0
    %v66 = vsel %vm40, %v23, 0
    %v69 = vsel %vm40, %v24, 0
    %v72 = vsel %vm40, %v25, 0
    %v75 = vsel %vm40, %v26, 0
    %v78 = vsel %vm40, %v27, 0
    %v81 = vsel %vm40, %v28, 0
    %v84 = vsel %vm40, %v29, 0
    %v87 = vsel %vm40, %v30, 0
    %89 = vmatprep.subr.mxu0 0.0
    %90 = vmatpush1.msra.mxu0 %v31
    %91 = vmatprep.subr.mxu0 0.0
    %92 = vmatpush1.msra.mxu0 %v32
    %93 = vmatprep.subr.mxu0 0.0
    %94 = vmatpush1.msra.mxu0 0.0
    %95 = vmatprep.subr.mxu0 0.0
    %96 = vmatpush1.msra.mxu0 0.0
    %97 = vmatprep.subr.mxu0 0.0
    %98 = vmatpush1.msra.mxu0 0.0
    %99 = vmatprep.subr.mxu0 0.0
    %100 = vmatpush1.msra.mxu0 0.0
    %101 = vmatprep.subr.mxu0 0.0
    %102 = vmatpush1.msra.mxu0 0.0
    %103 = vmatprep.subr.mxu0 0.0
    %104 = vmatpush1.msra.mxu0 0.0
    %105 = vmatprep.subr.mxu0 0.0
    %106 = vmatpush1.msra.mxu0 0.0
    %107 = vmatprep.subr.mxu0 0.0
    %108 = vmatpush1.msra.mxu0 0.0
    %109 = vmatprep.subr.mxu0 0.0
    %110 = vmatpush1.msra.mxu0 0.0
    %111 = vmatprep.subr.mxu0 0.0
    %112 = vmatpush1.msra.mxu0 0.0
    %113 = vmatprep.subr.mxu0 0.0
    %114 = vmatpush1.msra.mxu0 0.0
    %115 = vmatprep.subr.mxu0 0.0
    %116 = vmatpush1.msra.mxu0 0.0
    %117 = vmatprep.subr.mxu0 0.0
    %118 = vmatpush1.msra.mxu0 0.0
    %119 = vmatprep.subr.mxu0 0.0
    %120 = vmatpush1.msra.mxu0 0.0
    %121 = vmatprep.subr.mxu0 0.0
    %122 = vmatpush1.msra.mxu0 0.0
    %123 = vmatprep.subr.mxu0 0.0
    %124 = vmatpush1.msra.mxu0 0.0
    %125 = vmatprep.subr.mxu0 0.0
    %126 = vmatpush1.msra.mxu0 0.0
    %127 = vmatprep.subr.mxu0 0.0
    %128 = vmatpush1.msra.mxu0 0.0
    %129 = vmatprep.subr.mxu0 0.0
    %130 = vmatpush1.msra.mxu0 0.0
    %131 = vmatprep.subr.mxu0 0.0
    %132 = vmatpush1.msra.mxu0 0.0
    %133 = vmatprep.subr.mxu0 0.0
    %134 = vmatpush1.msra.mxu0 0.0
    %135 = vmatprep.subr.mxu0 0.0
    %136 = vmatpush1.msra.mxu0 0.0
    %137 = vmatprep.subr.mxu0 0.0
    %138 = vmatpush1.msra.mxu0 0.0
    %139 = vmatprep.subr.mxu0 0.0
    %140 = vmatpush1.msra.mxu0 0.0
    %141 = vmatprep.subr.mxu0 0.0
    %142 = vmatpush1.msra.mxu0 0.0
    %143 = vmatprep.subr.mxu0 0.0
    %144 = vmatpush1.msra.mxu0 0.0
    %145 = vmatprep.subr.mxu0 0.0
    %146 = vmatpush1.msra.mxu0 0.0
    %147 = vmatprep.subr.mxu0 0.0
    %148 = vmatpush1.msra.mxu0 0.0
    %149 = vmatprep.subr.mxu0 0.0
    %150 = vmatpush1.msra.mxu0 0.0
    %151 = vmatprep.subr.mxu0 0.0
    %152 = vmatpush1.msra.mxu0 0.0
    %153 = vmatprep.mubr.f32.mxu0 0.0
    %154 = vmatmul.mubr.f32.gmra.mrb[0].mxu0 %v42
    %v155 = vpop.f32.mrb[0].mxu0
    %v156 = vadd.f32 %v38, %v155
    %v157 = vpop.f32.mrb[0].mxu0
    %158 = vmatprep.mubr.f32.mxu0 0.0
    %159 = vmatmul.mubr.f32.gmra.mrb[0].mxu0 %v45
    %v160 = vpop.f32.mrb[0].mxu0
    %v161 = vadd.f32 %v38, %v160
    %v162 = vpop.f32.mrb[0].mxu0
    %163 = vmatprep.mubr.f32.mxu0 0.0
    %164 = vmatmul.mubr.f32.gmra.mrb[0].mxu0 %v48
    %v165 = vpop.f32.mrb[0].mxu0
    %v166 = vadd.f32 %v38, %v165
    %v167 = vpop.f32.mrb[0].mxu0
    %168 = vmatprep.mubr.f32.mxu0 0.0
    %169 = vmatmul.mubr.f32.gmra.mrb[0].mxu0 %v51
    %v170 = vpop.f32.mrb[0].mxu0
    %v171 = vadd.f32 %v38, %v170
    %v172 = vpop.f32.mrb[0].mxu0
    %173 = vmatprep.mubr.f32.mxu0 0.0
    %174 = vmatmul.mubr.f32.gmra.mrb[0].mxu0 %v54
    %v175 = vpop.f32.mrb[0].mxu0
    %v176 = vadd.f32 %v38, %v175
    %v177 = vpop.f32.mrb[0].mxu0
    %178 = vmatprep.mubr.f32.mxu0 0.0
    %179 = vmatmul.mubr.f32.gmra.mrb[0].mxu0 %v57
    %v180 = vpop.f32.mrb[0].mxu0
    %v181 = vadd.f32 %v38, %v180
    %v182 = vpop.f32.mrb[0].mxu0
    %183 = vmatprep.mubr.f32.mxu0 0.0
    %184 = vmatmul.mubr.f32.gmra.mrb[0].mxu0 %v60
    %v185 = vpop.f32.mrb[0].mxu0
    %v186 = vadd.f32 %v38, %v185
    %v187 = vpop.f32.mrb[0].mxu0
    %188 = vmatprep.mubr.f32.mxu0 0.0
    %189 = vmatmul.mubr.f32.gmra.mrb[0].mxu0 %v63
    %v190 = vpop.f32.mrb[0].mxu0
    %v191 = vadd.f32 %v38, %v190
    %v192 = vpop.f32.mrb[0].mxu0
    %193 = vmatprep.mubr.f32.mxu0 0.0
    %194 = vmatmul.mubr.f32.gmra.mrb[0].mxu0 %v66
    %v195 = vpop.f32.mrb[0].mxu0
    %v196 = vadd.f32 %v38, %v195
    %v197 = vpop.f32.mrb[0].mxu0
    %198 = vmatprep.mubr.f32.mxu0 0.0
    %199 = vmatmul.mubr.f32.gmra.mrb[0].mxu0 %v69
    %v200 = vpop.f32.mrb[0].mxu0
    %v201 = vadd.f32 %v38, %v200
    %v202 = vpop.f32.mrb[0].mxu0
    %203 = vmatprep.mubr.f32.mxu0 0.0
    %204 = vmatmul.mubr.f32.gmra.mrb[0].mxu0 %v72
    %v205 = vpop.f32.mrb[0].mxu0
    %v206 = vadd.f32 %v38, %v205
    %v207 = vpop.f32.mrb[0].mxu0
    %208 = vmatprep.mubr.f32.mxu0 0.0
    %209 = vmatmul.mubr.f32.gmra.mrb[0].mxu0 %v75
    %v210 = vpop.f32.mrb[0].mxu0
    %v211 = vadd.f32 %v38, %v210
    %v212 = vpop.f32.mrb[0].mxu0
    %213 = vmatprep.mubr.f32.mxu0 0.0
    %214 = vmatmul.mubr.f32.gmra.mrb[0].mxu0 %v78
    %v215 = vpop.f32.mrb[0].mxu0
    %v216 = vadd.f32 %v38, %v215
    %v217 = vpop.f32.mrb[0].mxu0
    %218 = vmatprep.mubr.f32.mxu0 0.0
    %219 = vmatmul.mubr.f32.gmra.mrb[0].mxu0 %v81
    %v220 = vpop.f32.mrb[0].mxu0
    %v221 = vadd.f32 %v38, %v220
    %v222 = vpop.f32.mrb[0].mxu0
    %223 = vmatprep.mubr.f32.mxu0 0.0
    %224 = vmatmul.mubr.f32.gmra.mrb[0].mxu0 %v84
    %v225 = vpop.f32.mrb[0].mxu0
    %v226 = vadd.f32 %v38, %v225
    %v227 = vpop.f32.mrb[0].mxu0
    %228 = vmatprep.mubr.f32.mxu0 0.0
    %229 = vmatmul.mubr.f32.gmra.mrb[0].mxu0 %v87
    %v230 = vpop.f32.mrb[0].mxu0
    %v231 = vadd.f32 %v38, %v230
    %v232 = vpop.f32.mrb[0].mxu0
    %233 = vdwg.mxu0
    %234 = vst [vmem:[#allocation2] sm:$0xff] %v156
    %235 = vst [vmem:[#allocation2 + $0x8] sm:$0xff] %v161
    %236 = vst [vmem:[#allocation2 + $0x10] sm:$0xff] %v166
    %237 = vst [vmem:[#allocation2 + $0x18] sm:$0xff] %v171
    %238 = vst [vmem:[#allocation2 + $0x20] sm:$0xff] %v176
    %239 = vst [vmem:[#allocation2 + $0x28] sm:$0xff] %v181
    %240 = vst [vmem:[#allocation2 + $0x30] sm:$0xff] %v186
    %241 = vst [vmem:[#allocation2 + $0x38] sm:$0xff] %v191
    %242 = vst [vmem:[#allocation2 + $0x40] sm:$0xff] %v196
    %243 = vst [vmem:[#allocation2 + $0x48] sm:$0xff] %v201
    %244 = vst [vmem:[#allocation2 + $0x50] sm:$0xff] %v206
    %245 = vst [vmem:[#allocation2 + $0x58] sm:$0xff] %v211
    %246 = vst [vmem:[#allocation2 + $0x60] sm:$0xff] %v216
    %247 = vst [vmem:[#allocation2 + $0x68] sm:$0xff] %v221
    %248 = vst [vmem:[#allocation2 + $0x70] sm:$0xff] %v226
    %249 = vst [vmem:[#allocation2 + $0x78] sm:$0xff] %v231
    // Predicated region
    $region14: #{tpu_custom_call.1} parent=1 // pred_check
      _
    $region15: #{tpu_custom_call.1} parent=1 // pred_check_branch
      %251 = sbr.rel (0) target = $region17
    $region16: #{tpu_custom_call.1} parent=1 // pred_region
      %s253 = ssub.s32 2048, 2048
      %254 = vsyncadd [#allocation3], %s253
      %s255 = sshll.u32 [#allocation2], 4
      %s256 = int_to_ptr.vmem [resolvable:$true] %s255
      %261 = dma.vmem_to_hbm [thread:$0]  %s256, 2048, %s3, [#allocation3], 128, 128, 8
    $region17: #{tpu_custom_call.1} parent=1 // pred_fallthru
      _
    // Predicated region
    $region18: #{tpu_custom_call.1} parent=1 // pred_check
      _
    $region19: #{tpu_custom_call.1} parent=1 // pred_check_branch
      %263 = sbr.rel (0) target = $region21
    $region20: #{tpu_custom_call.1} parent=1 // pred_region
      %264 = dma.done [#allocation3], 2048
    $region21: #{tpu_custom_call.1} parent=1 // pred_fallthru
      _
    %265 = vsyncpa [#allocation3], 1

</llo_original>
